<compile_context>
chip_gen: v5e
topology: v5e:2x2
jax: 0.10.0
libtpu: 0.0.40
codegen_flags: <defaults>
</compile_context>

<pallas_src>
import functools

import jax
import jax.numpy as jnp
import numpy as np
from jax.experimental import pallas as pl
from jax.experimental.pallas import tpu as pltpu

D_MODEL = 32
D_FF = 64
S_SEQ = 8
BATCH = 2

LANE = 128      # pad every feature (last) dim to a multiple of this
TILE_M = 128    # rows (sublanes) fed to the MXU per grid step


# --------------------------------- kernel ------------------------------------

def ffn_kernel(x_ref, w1_ref, b1_ref, w2_ref, b2_ref, out_ref):
    # x_ref: (TILE_M, DP)   w1: (DP, FP)  b1: (1, FP)
    # w2:    (FP, DP)       b2: (1, DP)   out: (TILE_M, DP)
    x = x_ref[...]
    h = jnp.dot(x, w1_ref[...], preferred_element_type=jnp.float32) + b1_ref[...]
    h = jnp.maximum(h, 0.0)                     # ReLU
    # TODO(synk): dropout is identity (eval mode); training-mode parity would
    # need pltpu.prng_seed / prng_random_bits + 1/(1-p) scaling.
    y = jnp.dot(h.astype(w2_ref.dtype), w2_ref[...],
                preferred_element_type=jnp.float32) + b2_ref[...]
    out_ref[...] = y.astype(out_ref.dtype)


# --------------------------------- wrapper -----------------------------------

def _round_up(n, m):
    return ((n + m - 1) // m) * m


def _pad_to(a, target_shape):
    pads = [(0, t - s) for s, t in zip(a.shape, target_shape)]
    return jnp.pad(a, pads)


@functools.partial(jax.jit, static_argnames=("tile_m",))
def feed_forward_block(x, w1, b1, w2, b2, *, tile_m=TILE_M):
    """x: (B, S, d_model); w1: (d_model, d_ff); b1: (d_ff,);
    w2: (d_ff, d_model); b2: (d_model,).  Weights are pre-transposed vs
    PyTorch's (out, in) layout."""
    B, S, D = x.shape
    d_ff = w1.shape[1]
    M = B * S

    # Pad feature dims to lane width and M to the row tile. Zero padding is
    # semantics-preserving: padded w1 rows / b1 cols are zero -> padded h cols
    # are ReLU(0)=0 -> padded w2 rows contribute nothing; padded rows/cols of
    # the output are sliced off below.
    DP = _round_up(D, LANE)
    FP = _round_up(d_ff, LANE)
    MP = _round_up(M, tile_m)

    x2d = _pad_to(x.reshape(M, D), (MP, DP))
    w1p = _pad_to(w1, (DP, FP))
    b1p = _pad_to(b1.reshape(1, -1), (1, FP))
    w2p = _pad_to(w2, (FP, DP))
    b2p = _pad_to(b2.reshape(1, -1), (1, DP))

    out2d = pl.pallas_call(
        ffn_kernel,
        out_shape=jax.ShapeDtypeStruct((MP, DP), x.dtype),
        grid=(MP // tile_m,),
        in_specs=[
            pl.BlockSpec((tile_m, DP), lambda i: (i, 0)),   # x: tile over rows
            pl.BlockSpec((DP, FP), lambda i: (0, 0)),       # w1: VMEM-resident
            pl.BlockSpec((1, FP), lambda i: (0, 0)),        # b1: VMEM-resident
            pl.BlockSpec((FP, DP), lambda i: (0, 0)),       # w2: VMEM-resident
            pl.BlockSpec((1, DP), lambda i: (0, 0)),        # b2: VMEM-resident
        ],
        out_specs=pl.BlockSpec((tile_m, DP), lambda i: (i, 0)),
        compiler_params=pltpu.CompilerParams(
            dimension_semantics=("parallel",)),              # 2 TCs on v7x
    )(x2d, w1p, b1p, w2p, b2p)

    return out2d[:M, :D].reshape(B, S, D)


# --------------------------- pure-JAX reference -------------------------------

def feed_forward_block_ref(x, w1, b1, w2, b2):
    h = jnp.maximum(x @ w1 + b1, 0.0)   # dropout = identity at inference
    return h @ w2 + b2


# ----------------------------------- main -------------------------------------

def init_linear(key, fan_in, fan_out):
    # torch.nn.Linear default init: U(-1/sqrt(fan_in), 1/sqrt(fan_in))
    kw, kb = jax.random.split(key)
    bound = 1.0 / np.sqrt(fan_in)
    w = jax.random.uniform(kw, (fan_in, fan_out), jnp.float32, -bound, bound)
    b = jax.random.uniform(kb, (fan_out,), jnp.float32, -bound, bound)
    return w, b


if __name__ == "__main__":
    root = jax.random.PRNGKey(0)
    k1, k2, kx = jax.random.split(root, 3)

    w1, b1 = init_linear(k1, D_MODEL, D_FF)
    w2, b2 = init_linear(k2, D_FF, D_MODEL)
    x = jax.random.normal(kx, (BATCH, S_SEQ, D_MODEL), jnp.float32)

    out = feed_forward_block(x, w1, b1, w2, b2)
    jax.block_until_ready(out)

    ref = feed_forward_block_ref(x, w1, b1, w2, b2)
    np.testing.assert_allclose(np.asarray(out), np.asarray(ref),
                               rtol=2e-5, atol=2e-5)

    print("KERNEL_OK")
</pallas_src>

<mosaic_0001>
module attributes {stable_mosaic.version = 11 : i64} {
  func.func @ffn_kernel(%arg0: i32, %arg1: memref<128x128xf32, #tpu.memory_space<vmem>>, %arg2: memref<128x128xf32, #tpu.memory_space<vmem>>, %arg3: memref<1x128xf32, #tpu.memory_space<vmem>>, %arg4: memref<128x128xf32, #tpu.memory_space<vmem>>, %arg5: memref<1x128xf32, #tpu.memory_space<vmem>>, %arg6: memref<128x128xf32, #tpu.memory_space<vmem>>) attributes {dimension_semantics = [#tpu.dimension_semantics<parallel>], iteration_bounds = array<i64: 1>, scalar_prefetch = 0 : i64, scratch_operands = 0 : i64, tpu.core_type = #tpu.core_type<tc>, window_params = [{transform_indices = @transform_0, window_bounds = array<i64: 128, 128>}, {pipeline_mode = #tpu.pipeline_mode<synchronous>, transform_indices = @transform_1, window_bounds = array<i64: 128, 128>}, {pipeline_mode = #tpu.pipeline_mode<synchronous>, transform_indices = @transform_2, window_bounds = array<i64: 1, 128>}, {pipeline_mode = #tpu.pipeline_mode<synchronous>, transform_indices = @transform_3, window_bounds = array<i64: 128, 128>}, {pipeline_mode = #tpu.pipeline_mode<synchronous>, transform_indices = @transform_4, window_bounds = array<i64: 1, 128>}, {transform_indices = @transform_5, window_bounds = array<i64: 128, 128>}]} {
    %c0 = arith.constant 0 : index
    %c0_0 = arith.constant 0 : index
    %0 = vector.load %arg1[%c0, %c0_0] : memref<128x128xf32, #tpu.memory_space<vmem>>, vector<128x128xf32>
    %c0_1 = arith.constant 0 : index
    %c0_2 = arith.constant 0 : index
    %1 = vector.load %arg2[%c0_1, %c0_2] : memref<128x128xf32, #tpu.memory_space<vmem>>, vector<128x128xf32>
    %cst = arith.constant dense<0.000000e+00> : vector<128x128xf32>
    %2 = tpu.matmul %0, %1, %cst {dimension_numbers = #tpu.dot_dimension_numbers<[1], [0], [0], [1], [0, 0, 1, 1], [], []>} : vector<128x128xf32>, vector<128x128xf32>, vector<128x128xf32> -> vector<128x128xf32>
    %c0_3 = arith.constant 0 : index
    %c0_4 = arith.constant 0 : index
    %3 = vector.load %arg3[%c0_3, %c0_4] : memref<1x128xf32, #tpu.memory_space<vmem>>, vector<1x128xf32>
    %4 = vector.broadcast %3 : vector<1x128xf32> to vector<128x128xf32>
    %5 = arith.addf %2, %4 : vector<128x128xf32>
    %cst_5 = arith.constant 0.000000e+00 : f32
    %6 = vector.broadcast %cst_5 : f32 to vector<128x128xf32>
    %7 = arith.maximumf %5, %6 : vector<128x128xf32>
    %c0_6 = arith.constant 0 : index
    %c0_7 = arith.constant 0 : index
    %8 = vector.load %arg4[%c0_6, %c0_7] : memref<128x128xf32, #tpu.memory_space<vmem>>, vector<128x128xf32>
    %cst_8 = arith.constant dense<0.000000e+00> : vector<128x128xf32>
    %9 = tpu.matmul %7, %8, %cst_8 {dimension_numbers = #tpu.dot_dimension_numbers<[1], [0], [0], [1], [0, 0, 1, 1], [], []>} : vector<128x128xf32>, vector<128x128xf32>, vector<128x128xf32> -> vector<128x128xf32>
    %c0_9 = arith.constant 0 : index
    %c0_10 = arith.constant 0 : index
    %10 = vector.load %arg5[%c0_9, %c0_10] : memref<1x128xf32, #tpu.memory_space<vmem>>, vector<1x128xf32>
    %11 = vector.broadcast %10 : vector<1x128xf32> to vector<128x128xf32>
    %12 = arith.addf %9, %11 : vector<128x128xf32>
    %c0_11 = arith.constant 0 : index
    %c0_12 = arith.constant 0 : index
    %13 = vector.load %arg6[%c0_11, %c0_12] : memref<128x128xf32, #tpu.memory_space<vmem>>, vector<128x128xf32>
    tpu.vector_store %arg6[%c0_11, %c0_12], %12 {strides = array<i32>} : memref<128x128xf32, #tpu.memory_space<vmem>>, vector<128x128xf32>,
    return
  }
  func.func @transform_0(%arg0: i32) -> (i32, i32) {
    %c0_i32 = arith.constant 0 : i32
    %c0_i32_0 = arith.constant 0 : i32
    return %arg0, %c0_i32 : i32, i32
  }
  func.func @transform_1(%arg0: i32) -> (i32, i32) {
    %c0_i32 = arith.constant 0 : i32
    %c0_i32_0 = arith.constant 0 : i32
    %c0_i32_1 = arith.constant 0 : i32
    return %c0_i32, %c0_i32_0 : i32, i32
  }
  func.func @transform_2(%arg0: i32) -> (i32, i32) {
    %c0_i32 = arith.constant 0 : i32
    %c0_i32_0 = arith.constant 0 : i32
    %c0_i32_1 = arith.constant 0 : i32
    return %c0_i32, %c0_i32_0 : i32, i32
  }
  func.func @transform_3(%arg0: i32) -> (i32, i32) {
    %c0_i32 = arith.constant 0 : i32
    %c0_i32_0 = arith.constant 0 : i32
    %c0_i32_1 = arith.constant 0 : i32
    return %c0_i32, %c0_i32_0 : i32, i32
  }
  func.func @transform_4(%arg0: i32) -> (i32, i32) {
    %c0_i32 = arith.constant 0 : i32
    %c0_i32_0 = arith.constant 0 : i32
    %c0_i32_1 = arith.constant 0 : i32
    return %c0_i32, %c0_i32_0 : i32, i32
  }
  func.func @transform_5(%arg0: i32) -> (i32, i32) {
    %c0_i32 = arith.constant 0 : i32
    %c0_i32_0 = arith.constant 0 : i32
    return %arg0, %c0_i32 : i32, i32
  }
}

</mosaic_0001>

<llo_original>
// kernel: feed_forward_block.1
$region0: #{feed_forward_block.1}
  #allocation0 [shape = 'u32[]', space=smem, size = 0x4, offset = 0x4, fixed_abs, tag = 'smem constant byte address 0x4 - core index']
  #allocation1 [shape = 'u32[72,128]{1,0:T(1,128)}', space=vmem, size = 0x9000, scoped, tag = 'internal scratch']
  %s0 = inlined_call_operand.vmem [shape: f32[128,128], index: 0, kind: input, shape index: {}]
  %s1 = inlined_call_operand.vmem [shape: f32[128,128], index: 1, kind: input, shape index: {}]
  %s2 = inlined_call_operand.vmem [shape: f32[1,128], index: 2, kind: input, shape index: {}]
  %s3 = inlined_call_operand.vmem [shape: f32[128,128], index: 3, kind: input, shape index: {}]
  %s4 = inlined_call_operand.vmem [shape: f32[1,128], index: 4, kind: input, shape index: {}]
  %s5 = inlined_call_operand.vmem [shape: f32[128,128], index: 5, kind: output, shape index: {}]
  %s6 = sld [smem:[#allocation0]]
  $region30: #{feed_forward_block.1} parent=0
    _
  %s8 = ssub.s32 1, %s6
  %s9 = scalar_select 0, %s8, %s6
  // Predicated region
  $region2: #{feed_forward_block.1} parent=0 // pred_check
    _
  $region3: #{feed_forward_block.1} parent=0 // pred_check_branch
    %11 = sbr.rel (0) target = $region5
  $region4: #{feed_forward_block.1} parent=0 // pred_region
    _
  $region5: #{feed_forward_block.1} parent=0 // pred_fallthru
    _
  // Predicated region
  $region6: #{feed_forward_block.1} parent=0 // pred_check
    _
  $region7: #{feed_forward_block.1} parent=0 // pred_check_branch
    %13 = sbr.rel (0) target = $region9
  $region8: #{feed_forward_block.1} parent=0 // pred_region
    _
  $region9: #{feed_forward_block.1} parent=0 // pred_fallthru
    _
  // Predicated region
  $region10: #{feed_forward_block.1} parent=0 // pred_check
    _
  $region11: #{feed_forward_block.1} parent=0 // pred_check_branch
    %15 = sbr.rel (0) target = $region13
  $region12: #{feed_forward_block.1} parent=0 // pred_region
    _
  $region13: #{feed_forward_block.1} parent=0 // pred_fallthru
    _
  // Predicated region
  $region14: #{feed_forward_block.1} parent=0 // pred_check
    _
  $region15: #{feed_forward_block.1} parent=0 // pred_check_branch
    %17 = sbr.rel (0) target = $region17
  $region16: #{feed_forward_block.1} parent=0 // pred_region
    _
  $region17: #{feed_forward_block.1} parent=0 // pred_fallthru
    _
  // Predicated region
  $region18: #{feed_forward_block.1} parent=0 // pred_check
    _
  $region19: #{feed_forward_block.1} parent=0 // pred_check_branch
    %19 = sbr.rel (0) target = $region21
  $region20: #{feed_forward_block.1} parent=0 // pred_region
    _
  $region21: #{feed_forward_block.1} parent=0 // pred_fallthru
    _
  %v20 = vld [vmem:[%s0] sm:$0xff]
  %v21 = vld [vmem:[%s0 + $0x8] sm:$0xff]
  %v22 = vld [vmem:[%s0 + $0x10] sm:$0xff]
  %v23 = vld [vmem:[%s0 + $0x18] sm:$0xff]
  %v24 = vld [vmem:[%s0 + $0x20] sm:$0xff]
  %v25 = vld [vmem:[%s0 + $0x28] sm:$0xff]
  %v26 = vld [vmem:[%s0 + $0x30] sm:$0xff]
  %v27 = vld [vmem:[%s0 + $0x38] sm:$0xff]
  %v28 = vld [vmem:[%s0 + $0x40] sm:$0xff]
  %v29 = vld [vmem:[%s0 + $0x48] sm:$0xff]
  %v30 = vld [vmem:[%s0 + $0x50] sm:$0xff]
  %v31 = vld [vmem:[%s0 + $0x58] sm:$0xff]
  %v32 = vld [vmem:[%s0 + $0x60] sm:$0xff]
  %v33 = vld [vmem:[%s0 + $0x68] sm:$0xff]
  %v34 = vld [vmem:[%s0 + $0x70] sm:$0xff]
  %v35 = vld [vmem:[%s0 + $0x78] sm:$0xff]
  %v36 = vld [vmem:[%s1] sm:$0xff]
  %v37 = vld [vmem:[%s1 + $0x8] sm:$0xff]
  %v38 = vld [vmem:[%s1 + $0x10] sm:$0xff]
  %v39 = vld [vmem:[%s1 + $0x18] sm:$0xff]
  %v40 = vld [vmem:[%s1 + $0x20] sm:$0xff]
  %v41 = vld [vmem:[%s1 + $0x28] sm:$0xff]
  %v42 = vld [vmem:[%s1 + $0x30] sm:$0xff]
  %v43 = vld [vmem:[%s1 + $0x38] sm:$0xff]
  %v44 = vld [vmem:[%s1 + $0x40] sm:$0xff]
  %v45 = vld [vmem:[%s1 + $0x48] sm:$0xff]
  %v46 = vld [vmem:[%s1 + $0x50] sm:$0xff]
  %v47 = vld [vmem:[%s1 + $0x58] sm:$0xff]
  %v48 = vld [vmem:[%s1 + $0x60] sm:$0xff]
  %v49 = vld [vmem:[%s1 + $0x68] sm:$0xff]
  %v50 = vld [vmem:[%s1 + $0x70] sm:$0xff]
  %v51 = vld [vmem:[%s1 + $0x78] sm:$0xff]
  %v52 = vld [vmem:[%s2] sm:$0x1]
  %v54 = vperm.slane %v52, 0
  %56 = vmatpush.msra.mxu0 %v51
  %57 = vmatpush.msra.mxu0 %v50
  %58 = vmatpush.msra.mxu0 %v49
  %59 = vmatpush.msra.mxu0 %v48
  %60 = vmatpush.msra.mxu0 %v47
  %61 = vmatpush.msra.mxu0 %v46
  %62 = vmatpush.msra.mxu0 %v45
  %63 = vmatpush.msra.mxu0 %v44
  %64 = vmatpush.msra.mxu0 %v43
  %65 = vmatpush.msra.mxu0 %v42
  %66 = vmatpush.msra.mxu0 %v41
  %67 = vmatpush.msra.mxu0 %v40
  %68 = vmatpush.msra.mxu0 %v39
  %69 = vmatpush.msra.mxu0 %v38
  %70 = vmatpush.msra.mxu0 %v37
  %71 = vmatpush.msra.mxu0 %v36
  %72 = vmatmul.f32.gmra.mxu0 %v20
  %v73 = vpop.f32.mrf.mxu0
  %v74 = vadd.f32 %v54, %v73
  %75 = vmatmul.f32.gmra.mxu0 %v21
  %v76 = vpop.f32.mrf.mxu0
  %v77 = vadd.f32 %v54, %v76
  %78 = vmatmul.f32.gmra.mxu0 %v22
  %v79 = vpop.f32.mrf.mxu0
  %v80 = vadd.f32 %v54, %v79
  %81 = vmatmul.f32.gmra.mxu0 %v23
  %v82 = vpop.f32.mrf.mxu0
  %v83 = vadd.f32 %v54, %v82
  %84 = vmatmul.f32.gmra.mxu0 %v24
  %v85 = vpop.f32.mrf.mxu0
  %v86 = vadd.f32 %v54, %v85
  %87 = vmatmul.f32.gmra.mxu0 %v25
  %v88 = vpop.f32.mrf.mxu0
  %v89 = vadd.f32 %v54, %v88
  %90 = vmatmul.f32.gmra.mxu0 %v26
  %v91 = vpop.f32.mrf.mxu0
  %v92 = vadd.f32 %v54, %v91
  %93 = vmatmul.f32.gmra.mxu0 %v27
  %v94 = vpop.f32.mrf.mxu0
  %v95 = vadd.f32 %v54, %v94
  %96 = vmatmul.f32.gmra.mxu0 %v28
  %v97 = vpop.f32.mrf.mxu0
  %v98 = vadd.f32 %v54, %v97
  %99 = vmatmul.f32.gmra.mxu0 %v29
  %v100 = vpop.f32.mrf.mxu0
  %v101 = vadd.f32 %v54, %v100
  %102 = vmatmul.f32.gmra.mxu0 %v30
  %v103 = vpop.f32.mrf.mxu0
  %v104 = vadd.f32 %v54, %v103
  %105 = vmatmul.f32.gmra.mxu0 %v31
  %v106 = vpop.f32.mrf.mxu0
  %v107 = vadd.f32 %v54, %v106
  %108 = vmatmul.f32.gmra.mxu0 %v32
  %v109 = vpop.f32.mrf.mxu0
  %v110 = vadd.f32 %v54, %v109
  %111 = vmatmul.f32.gmra.mxu0 %v33
  %v112 = vpop.f32.mrf.mxu0
  %v113 = vadd.f32 %v54, %v112
  %114 = vmatmul.f32.gmra.mxu0 %v34
  %v115 = vpop.f32.mrf.mxu0
  %v116 = vadd.f32 %v54, %v115
  %117 = vmatmul.f32.gmra.mxu0 %v35
  %v118 = vpop.f32.mrf.mxu0
  %v119 = vadd.f32 %v54, %v118
  %120 = vdwg.mxu0
  %v121 = vmax.f32 %v74, 0.0
  %v122 = vmax.f32 %v77, 0.0
  %v123 = vmax.f32 %v80, 0.0
  %v124 = vmax.f32 %v83, 0.0
  %v125 = vmax.f32 %v86, 0.0
  %v126 = vmax.f32 %v89, 0.0
  %v127 = vmax.f32 %v92, 0.0
  %v128 = vmax.f32 %v95, 0.0
  %v129 = vmax.f32 %v98, 0.0
  %v130 = vmax.f32 %v101, 0.0
  %v131 = vmax.f32 %v104, 0.0
  %v132 = vmax.f32 %v107, 0.0
  %v133 = vmax.f32 %v110, 0.0
  %v134 = vmax.f32 %v113, 0.0
  %v135 = vmax.f32 %v116, 0.0
  %v136 = vmax.f32 %v119, 0.0
  %v137 = vld [vmem:[%s3] sm:$0xff]
  %v138 = vld [vmem:[%s3 + $0x8] sm:$0xff]
  %v139 = vld [vmem:[%s3 + $0x10] sm:$0xff]
  %v140 = vld [vmem:[%s3 + $0x18] sm:$0xff]
  %v141 = vld [vmem:[%s3 + $0x20] sm:$0xff]
  %v142 = vld [vmem:[%s3 + $0x28] sm:$0xff]
  %v143 = vld [vmem:[%s3 + $0x30] sm:$0xff]
  %v144 = vld [vmem:[%s3 + $0x38] sm:$0xff]
  %v145 = vld [vmem:[%s3 + $0x40] sm:$0xff]
  %v146 = vld [vmem:[%s3 + $0x48] sm:$0xff]
  %v147 = vld [vmem:[%s3 + $0x50] sm:$0xff]
  %v148 = vld [vmem:[%s3 + $0x58] sm:$0xff]
  %v149 = vld [vmem:[%s3 + $0x60] sm:$0xff]
  %v150 = vld [vmem:[%s3 + $0x68] sm:$0xff]
  %v151 = vld [vmem:[%s3 + $0x70] sm:$0xff]
  %v152 = vld [vmem:[%s3 + $0x78] sm:$0xff]
  %v153 = vld [vmem:[%s4] sm:$0x1]
  %v155 = vperm.slane %v153, 0
  %157 = vmatpush.msra.mxu0 %v152
  %158 = vmatpush.msra.mxu0 %v151
  %159 = vmatpush.msra.mxu0 %v150
  %160 = vmatpush.msra.mxu0 %v149
  %161 = vmatpush.msra.mxu0 %v148
  %162 = vmatpush.msra.mxu0 %v147
  %163 = vmatpush.msra.mxu0 %v146
  %164 = vmatpush.msra.mxu0 %v145
  %165 = vmatpush.msra.mxu0 %v144
  %166 = vmatpush.msra.mxu0 %v143
  %167 = vmatpush.msra.mxu0 %v142
  %168 = vmatpush.msra.mxu0 %v141
  %169 = vmatpush.msra.mxu0 %v140
  %170 = vmatpush.msra.mxu0 %v139
  %171 = vmatpush.msra.mxu0 %v138
  %172 = vmatpush.msra.mxu0 %v137
  %173 = vmatmul.f32.gmra.mxu0 %v121
  %v174 = vpop.f32.mrf.mxu0
  %v175 = vadd.f32 %v155, %v174
  %176 = vmatmul.f32.gmra.mxu0 %v122
  %v177 = vpop.f32.mrf.mxu0
  %v178 = vadd.f32 %v155, %v177
  %179 = vmatmul.f32.gmra.mxu0 %v123
  %v180 = vpop.f32.mrf.mxu0
  %v181 = vadd.f32 %v155, %v180
  %182 = vmatmul.f32.gmra.mxu0 %v124
  %v183 = vpop.f32.mrf.mxu0
  %v184 = vadd.f32 %v155, %v183
  %185 = vmatmul.f32.gmra.mxu0 %v125
  %v186 = vpop.f32.mrf.mxu0
  %v187 = vadd.f32 %v155, %v186
  %188 = vmatmul.f32.gmra.mxu0 %v126
  %v189 = vpop.f32.mrf.mxu0
  %v190 = vadd.f32 %v155, %v189
  %191 = vmatmul.f32.gmra.mxu0 %v127
  %v192 = vpop.f32.mrf.mxu0
  %v193 = vadd.f32 %v155, %v192
  %194 = vmatmul.f32.gmra.mxu0 %v128
  %v195 = vpop.f32.mrf.mxu0
  %v196 = vadd.f32 %v155, %v195
  %197 = vmatmul.f32.gmra.mxu0 %v129
  %v198 = vpop.f32.mrf.mxu0
  %v199 = vadd.f32 %v155, %v198
  %200 = vmatmul.f32.gmra.mxu0 %v130
  %v201 = vpop.f32.mrf.mxu0
  %v202 = vadd.f32 %v155, %v201
  %203 = vmatmul.f32.gmra.mxu0 %v131
  %v204 = vpop.f32.mrf.mxu0
  %v205 = vadd.f32 %v155, %v204
  %206 = vmatmul.f32.gmra.mxu0 %v132
  %v207 = vpop.f32.mrf.mxu0
  %v208 = vadd.f32 %v155, %v207
  %209 = vmatmul.f32.gmra.mxu0 %v133
  %v210 = vpop.f32.mrf.mxu0
  %v211 = vadd.f32 %v155, %v210
  %212 = vmatmul.f32.gmra.mxu0 %v134
  %v213 = vpop.f32.mrf.mxu0
  %v214 = vadd.f32 %v155, %v213
  %215 = vmatmul.f32.gmra.mxu0 %v135
  %v216 = vpop.f32.mrf.mxu0
  %v217 = vadd.f32 %v155, %v216
  %218 = vmatmul.f32.gmra.mxu0 %v136
  %v219 = vpop.f32.mrf.mxu0
  %v220 = vadd.f32 %v155, %v219
  %221 = vdwg.mxu0
  %222 = vst [vmem:[%s5] sm:$0xff] %v175
  %223 = vst [vmem:[%s5 + $0x8] sm:$0xff] %v178
  %224 = vst [vmem:[%s5 + $0x10] sm:$0xff] %v181
  %225 = vst [vmem:[%s5 + $0x18] sm:$0xff] %v184
  %226 = vst [vmem:[%s5 + $0x20] sm:$0xff] %v187
  %227 = vst [vmem:[%s5 + $0x28] sm:$0xff] %v190
  %228 = vst [vmem:[%s5 + $0x30] sm:$0xff] %v193
  %229 = vst [vmem:[%s5 + $0x38] sm:$0xff] %v196
  %230 = vst [vmem:[%s5 + $0x40] sm:$0xff] %v199
  %231 = vst [vmem:[%s5 + $0x48] sm:$0xff] %v202
  %232 = vst [vmem:[%s5 + $0x50] sm:$0xff] %v205
  %233 = vst [vmem:[%s5 + $0x58] sm:$0xff] %v208
  %234 = vst [vmem:[%s5 + $0x60] sm:$0xff] %v211
  %235 = vst [vmem:[%s5 + $0x68] sm:$0xff] %v214
  %236 = vst [vmem:[%s5 + $0x70] sm:$0xff] %v217
  %237 = vst [vmem:[%s5 + $0x78] sm:$0xff] %v220
  // Predicated region
  $region22: #{feed_forward_block.1} parent=0 // pred_check
    _
  $region23: #{feed_forward_block.1} parent=0 // pred_check_branch
    %239 = sbr.rel (0) target = $region25
  $region24: #{feed_forward_block.1} parent=0 // pred_region
    _
  $region25: #{feed_forward_block.1} parent=0 // pred_fallthru
    _
  // Predicated region
  $region26: #{feed_forward_block.1} parent=0 // pred_check
    _
  $region27: #{feed_forward_block.1} parent=0 // pred_check_branch
    %241 = sbr.rel (0) target = $region29
  $region28: #{feed_forward_block.1} parent=0 // pred_region
    _
  $region29: #{feed_forward_block.1} parent=0 // pred_fallthru
    _

</llo_original>
